<compile_context>
chip_gen: v6e
topology: v6e:2x2x1
jax: 0.10.0
libtpu: 0.0.40
codegen_flags: <defaults>
</compile_context>

<pallas_src>
import jax
import jax.numpy as jnp
from jax.experimental import pallas as pl
from jax.experimental.pallas import tpu as pltpu

LANES = 128            # vreg lane width
SUBLANES = 8           # f32 sublane granularity
MAX_TILE_ROWS = 2048   # (2048, 128) f32 = 1 MiB per block


def _round_up(x: int, m: int) -> int:
    return ((x + m - 1) // m) * m


def _row_axis_semantics():
    """CORE_PARALLEL on v7x (2 TCs/chip); plain 'parallel' elsewhere."""
    try:
        kind = jax.devices()[0].device_kind.lower()
    except Exception:  # pragma: no cover - defensive; default is safe
        kind = ""
    if "v7" in kind:
        return (pltpu.CORE_PARALLEL,)
    return ("parallel",)


def linear_kernel(x_ref, wb_ref, o_ref):
    # x_ref : (tile_rows, 128) VMEM block of inputs (lane-dense)
    # wb_ref: (2,) SMEM scalars -> [weight W[0,0], bias b[0]]
    # o_ref : (tile_rows, 128) VMEM block of outputs
    o_ref[...] = x_ref[...] * wb_ref[0] + wb_ref[1]


def linear_forward(x, weight, bias, *, max_tile_rows=MAX_TILE_ROWS,
                   small_n_threshold=2048):
    """x: (N, 1) f32; weight: (1, 1) f32; bias: (1,) f32 -> (N, 1) f32."""
    n, in_f = x.shape
    assert in_f == 1 and weight.shape == (1, 1) and bias.shape == (1,)

    # ---- small-N fast path: a fused XLA FMA beats kernel launch overhead ----
    if n < small_n_threshold:
        return x * weight[0, 0] + bias[0]

    # ---- lane-dense layout plumbing (reshape + minimal (8,128)-granule pad) ----
    rows = pl.cdiv(n, LANES)                       # rows of the (R, 128) slab
    rows_padded = _round_up(rows, SUBLANES)        # only to sublane granule
    n_padded = rows_padded * LANES
    tile_rows = min(max_tile_rows, rows_padded)    # both are multiples of 8
    grid = (pl.cdiv(rows_padded, tile_rows),)      # ragged last block is OK

    x_flat = x.reshape(-1)
    if n_padded != n:
        x_flat = jnp.pad(x_flat, (0, n_padded - n))
    x2d = x_flat.reshape(rows_padded, LANES)

    # Pack weight & bias into one (2,) SMEM operand.
    wb = jnp.concatenate([weight.reshape(-1), bias.reshape(-1)])

    out2d = pl.pallas_call(
        linear_kernel,
        out_shape=jax.ShapeDtypeStruct((rows_padded, LANES), x.dtype),
        grid=grid,
        in_specs=[
            pl.BlockSpec((tile_rows, LANES), lambda i: (i, 0)),    # x tile (VMEM)
            pl.BlockSpec(memory_space=pltpu.MemorySpace.SMEM),     # [w, b] scalars
        ],
        out_specs=pl.BlockSpec((tile_rows, LANES), lambda i: (i, 0)),
        compiler_params=pltpu.CompilerParams(
            dimension_semantics=_row_axis_semantics(),
            allow_input_fusion=[True, False],   # let XLA fuse pad/reshape into input
        ),
        cost_estimate=pl.CostEstimate(
            flops=2 * n_padded,                 # one FMA per element
            transcendentals=0,
            bytes_accessed=8 * n_padded,        # read + write, f32
        ),
    )(x2d, wb)

    # Slice off the padding and restore the (N, 1) PyTorch layout.
    return out2d.reshape(-1)[:n].reshape(n, 1)


if __name__ == "__main__":
    key = jax.random.PRNGKey(0)
    k_x, k_w, k_b = jax.random.split(key, 3)

    # Small shapes consistent with the module: batch=16, in_features=1.
    N = 16
    x = jax.random.normal(k_x, (N, 1), dtype=jnp.float32)

    # nn.Linear(1, 1) parameter shapes: W (1, 1), b (1,).
    weight = jax.random.uniform(k_w, (1, 1), dtype=jnp.float32, minval=-1.0, maxval=1.0)
    bias = jax.random.uniform(k_b, (1,), dtype=jnp.float32, minval=-1.0, maxval=1.0)

    ref = x @ weight.T + bias

    # Force the Pallas path even at tiny N so the kernel itself executes once.
    out = jax.block_until_ready(linear_forward(x, weight, bias, small_n_threshold=0))
    assert out.shape == (N, 1) and out.dtype == jnp.float32
    assert jnp.allclose(out, ref, atol=1e-6, rtol=1e-6)

    # Default path at the same small shape takes the fused-XLA fast path.
    out_fast = jax.block_until_ready(linear_forward(x, weight, bias))
    assert jnp.allclose(out_fast, ref, atol=1e-6, rtol=1e-6)

    # Larger, non-multiple-of-128 batch exercising the padded Pallas path.
    N2 = 5000
    x2 = jax.random.normal(k_x, (N2, 1), dtype=jnp.float32)
    out2 = jax.block_until_ready(linear_forward(x2, weight, bias))
    ref2 = x2 @ weight.T + bias
    assert out2.shape == (N2, 1)
    assert jnp.allclose(out2, ref2, atol=1e-6, rtol=1e-6)

    print("KERNEL_OK")
</pallas_src>

<mosaic_0001>
module attributes {stable_mosaic.version = 11 : i64} {
  func.func @linear_kernel(%arg0: i32, %arg1: memref<8x128xf32, #tpu.memory_space<vmem>>, %arg2: memref<2xf32, #tpu.memory_space<smem>>, %arg3: memref<8x128xf32, #tpu.memory_space<vmem>>) attributes {dimension_semantics = [#tpu.dimension_semantics<parallel>], iteration_bounds = array<i64: 1>, scalar_prefetch = 0 : i64, scratch_operands = 0 : i64, tpu.core_type = #tpu.core_type<tc>, window_params = [{transform_indices = @transform_0, window_bounds = array<i64: 8, 128>}, {transform_indices = @transform_1, window_bounds = array<i64: 2>}, {transform_indices = @transform_2, window_bounds = array<i64: 8, 128>}]} {
    %c0 = arith.constant 0 : index
    %c0_0 = arith.constant 0 : index
    %0 = vector.load %arg1[%c0, %c0_0] : memref<8x128xf32, #tpu.memory_space<vmem>>, vector<8x128xf32>
    %c0_1 = arith.constant 0 : index
    %1 = memref.load %arg2[%c0_1] : memref<2xf32, #tpu.memory_space<smem>>
    %2 = vector.broadcast %1 : f32 to vector<8x128xf32>
    %3 = arith.mulf %0, %2 : vector<8x128xf32>
    %c1 = arith.constant 1 : index
    %4 = memref.load %arg2[%c1] : memref<2xf32, #tpu.memory_space<smem>>
    %5 = vector.broadcast %4 : f32 to vector<8x128xf32>
    %6 = arith.addf %3, %5 : vector<8x128xf32>
    %c0_2 = arith.constant 0 : index
    %c0_3 = arith.constant 0 : index
    %7 = vector.load %arg3[%c0_2, %c0_3] : memref<8x128xf32, #tpu.memory_space<vmem>>, vector<8x128xf32>
    tpu.vector_store %arg3[%c0_2, %c0_3], %6 {strides = array<i32>} : memref<8x128xf32, #tpu.memory_space<vmem>>, vector<8x128xf32>,
    return
  }
  func.func @transform_0(%arg0: i32) -> (i32, i32) {
    %c0_i32 = arith.constant 0 : i32
    %c0_i32_0 = arith.constant 0 : i32
    return %arg0, %c0_i32 : i32, i32
  }
  func.func @transform_1(%arg0: i32) -> i32 {
    %c0_i32 = arith.constant 0 : i32
    %c0_i32_0 = arith.constant 0 : i32
    return %c0_i32 : i32
  }
  func.func @transform_2(%arg0: i32) -> (i32, i32) {
    %c0_i32 = arith.constant 0 : i32
    %c0_i32_0 = arith.constant 0 : i32
    return %arg0, %c0_i32 : i32, i32
  }
}

</mosaic_0001>

<llo_original>
// kernel: tpu_custom_call.1
$region0: #{tpu_custom_call.1}
  #allocation0 [shape = 'u32[]', space=smem, size = 0x4, offset = 0x4, fixed_abs, tag = 'smem constant byte address 0x4 - core index']
  #allocation1 [shape = 'u32[144,128]{1,0:T(1,128)}', space=vmem, size = 0x12000, scoped, tag = 'internal scratch']
  %s0 = inlined_call_operand.hbm [shape: f32[8,128], index: 0, kind: input, shape index: {}]
  %s1 = inlined_call_operand.vmem [shape: f32[2], index: 1, kind: input, shape index: {}]
  %s2 = inlined_call_operand.hbm [shape: f32[8,128], index: 2, kind: output, shape index: {}]
  %s3 = sld [smem:[#allocation0]]
  $region26: #{tpu_custom_call.1} parent=0
    _
  %s5 = ssub.s32 1, %s3
  %s6 = scalar_select 0, %s5, %s3
  $region1: #{tpu_custom_call.1} parent=0
    #allocation2 [shape = 'u8[4096]{0}', space=vmem, size = 0x1000, scoped, tag = 'input window, operand 0, single buffered']
    #allocation3 [shape = 's32[1]{0}', space=sflag, size = 0x4, scoped, tag = 'scoped memory for tpu_custom_call.1']
    #allocation4 [shape = 's32[1]{0}', space=sflag, size = 0x4, scoped, tag = 'scoped memory for tpu_custom_call.1']
    #allocation5 [shape = 's32[1]{0}', space=sflag, size = 0x4, scoped, tag = 'scoped memory for tpu_custom_call.1']
    #allocation6 [shape = 'u8[512]{0}', space=smem, size = 0x200, scoped, tag = 'input window, operand 1, single buffered']
    #allocation7 [shape = 'u8[4096]{0}', space=vmem, size = 0x1000, scoped, tag = 'output window, operand 0, single buffered']
    %7 = vsyncpa [#allocation3], 0
    %8 = vsyncpa [#allocation5], 0
    %9 = vsyncpa [#allocation4], 0
    // Predicated region
    $region2: #{tpu_custom_call.1} parent=1 // pred_check
      _
    $region3: #{tpu_custom_call.1} parent=1 // pred_check_branch
      %11 = sbr.rel (0) target = $region5
    $region4: #{tpu_custom_call.1} parent=1 // pred_region
      %s13 = ssub.s32 128, 128
      %14 = vsyncadd [#allocation3], %s13
      %s16 = sshll.u32 [#allocation2], 4
      %s17 = int_to_ptr.vmem [resolvable:$true] %s16
      %19 = dma.hbm_to_vmem [thread:$0]  %s0, 128, %s17, [#allocation3]
    $region5: #{tpu_custom_call.1} parent=1 // pred_fallthru
      _
    // Predicated region
    $region6: #{tpu_custom_call.1} parent=1 // pred_check
      _
    $region7: #{tpu_custom_call.1} parent=1 // pred_check_branch
      %21 = sbr.rel (0) target = $region9
    $region8: #{tpu_custom_call.1} parent=1 // pred_region
      %s23 = ssub.s32 16, 16
      %24 = vsyncadd [#allocation5], %s23
      %s26 = sshll.u32 %s1, 4
      %s27 = int_to_ptr.vmem [resolvable:$true] %s26
      %29 = dma.vmem_to_smem %s27, 16, [#allocation6], [#allocation5]
    $region9: #{tpu_custom_call.1} parent=1 // pred_fallthru
      _
    // Predicated region
    $region10: #{tpu_custom_call.1} parent=1 // pred_check
      _
    $region11: #{tpu_custom_call.1} parent=1 // pred_check_branch
      %31 = sbr.rel (0) target = $region13
    $region12: #{tpu_custom_call.1} parent=1 // pred_region
      %32 = dma.done [#allocation3], 128
    $region13: #{tpu_custom_call.1} parent=1 // pred_fallthru
      _
    // Predicated region
    $region14: #{tpu_custom_call.1} parent=1 // pred_check
      _
    $region15: #{tpu_custom_call.1} parent=1 // pred_check_branch
      %34 = sbr.rel (0) target = $region17
    $region16: #{tpu_custom_call.1} parent=1 // pred_region
      %35 = dma.done [#allocation5], 16
    $region17: #{tpu_custom_call.1} parent=1 // pred_fallthru
      _
    %36 = sfence
    %v37 = vld [vmem:[#allocation2] sm:$0xff]
    %s38 = sld [smem:[#allocation6]]
    %v39 = vstv %s38
    %v40 = vmul.f32 %v37, %v39
    %s41 = sld [smem:[#allocation6 + $0x1]]
    %v42 = vstv %s41
    %v43 = vadd.f32 %v40, %v42
    %44 = vst [vmem:[#allocation7] sm:$0xff] %v43
    // Predicated region
    $region18: #{tpu_custom_call.1} parent=1 // pred_check
      _
    $region19: #{tpu_custom_call.1} parent=1 // pred_check_branch
      %46 = sbr.rel (0) target = $region21
    $region20: #{tpu_custom_call.1} parent=1 // pred_region
      %s48 = ssub.s32 128, 128
      %49 = vsyncadd [#allocation4], %s48
      %s51 = sshll.u32 [#allocation7], 4
      %s52 = int_to_ptr.vmem [resolvable:$true] %s51
      %54 = dma.vmem_to_hbm [thread:$0]  %s52, 128, %s2, [#allocation4]
    $region21: #{tpu_custom_call.1} parent=1 // pred_fallthru
      _
    // Predicated region
    $region22: #{tpu_custom_call.1} parent=1 // pred_check
      _
    $region23: #{tpu_custom_call.1} parent=1 // pred_check_branch
      %56 = sbr.rel (0) target = $region25
    $region24: #{tpu_custom_call.1} parent=1 // pred_region
      %57 = dma.done [#allocation4], 128
    $region25: #{tpu_custom_call.1} parent=1 // pred_fallthru
      _
    %58 = vsyncpa [#allocation3], 1
    %59 = vsyncpa [#allocation4], 1
    %60 = vsyncpa [#allocation5], 1

</llo_original>
